<compile_context>
chip_gen: v6e
topology: v6e:2x2x1
jax: 0.10.0
libtpu: 0.0.40
codegen_flags: <defaults>
</compile_context>

<pallas_src>
import jax
import jax.numpy as jnp
from jax import lax
from jax.experimental import pallas as pl
from jax.experimental.pallas import tpu as pltpu


def mlp_logsoftmax_kernel(x_ref, w1_ref, b1_ref, w2_ref, b2_ref, o_ref):
    """Batch-on-lanes MLP.

    x_ref:  (bt, In)   input rows (batch tile)
    w1_ref: (H, In)    fc1 weight, native PyTorch (out, in) layout
    b1_ref: (H, 1)     fc1 bias as a column
    w2_ref: (H, C)     fc2 weight columns (pre-transposed once at init)
    b2_ref: (C, 1)     fc2 bias as a column
    o_ref:  (C, bt)    log-softmax over classes, class-major / batch-on-lanes
    """
    # fc1 on the MXU: contract the feature axis of both operands -> (H, bt).
    h = lax.dot_general(
        w1_ref[...], x_ref[...],
        dimension_numbers=(((1,), (1,)), ((), ())),
        preferred_element_type=jnp.float32)
    h = jnp.maximum(h + b1_ref[...], 0.0)                     # (H, bt)

    C = o_ref.shape[0]
    if C == 2:
        # fc2 on the VPU: logits[c, :] = sum_h w2[h, c] * h[h, :] + b2[c].
        wcol = w2_ref[...]                                    # (H, 2)
        l0 = jnp.sum(wcol[:, 0:1] * h, axis=0, keepdims=True) + b2_ref[0:1, :]
        l1 = jnp.sum(wcol[:, 1:2] * h, axis=0, keepdims=True) + b2_ref[1:2, :]
        # Two-class closed form: logsumexp(l0, l1) = max + log(1 + exp(-|l0-l1|)).
        d = jnp.abs(l0 - l1)
        lse = jnp.maximum(l0, l1) + jnp.log(1.0 + jnp.exp(-d))
        out = jnp.concatenate([l0 - lse, l1 - lse], axis=0)   # (2, bt), single store
        o_ref[...] = out.astype(o_ref.dtype)
    else:
        # General fallback (not used by this module, which fixes C == 2).
        logits = lax.dot_general(
            w2_ref[...], h,
            dimension_numbers=(((0,), (0,)), ((), ())),
            preferred_element_type=jnp.float32) + b2_ref[...]
        m = jnp.max(logits, axis=0, keepdims=True)
        lse = m + jnp.log(jnp.sum(jnp.exp(logits - m), axis=0, keepdims=True))
        o_ref[...] = (logits - lse).astype(o_ref.dtype)


def init_params(key, input_size, hidden_size, num_classes):
    """Deterministic init mirroring nn.Linear's U(-1/sqrt(fan_in), 1/sqrt(fan_in)).

    Returns params in PyTorch layout: w1 (H, In), b1 (H,), w2 (C, H), b2 (C,).
    """
    k1, k2, k3, k4 = jax.random.split(key, 4)
    bound1 = 1.0 / jnp.sqrt(jnp.float32(input_size))
    bound2 = 1.0 / jnp.sqrt(jnp.float32(hidden_size))
    w1 = jax.random.uniform(k1, (hidden_size, input_size), jnp.float32, -bound1, bound1)
    b1 = jax.random.uniform(k2, (hidden_size,), jnp.float32, -bound1, bound1)
    w2 = jax.random.uniform(k3, (num_classes, hidden_size), jnp.float32, -bound2, bound2)
    b2 = jax.random.uniform(k4, (num_classes,), jnp.float32, -bound2, bound2)
    return w1, b1, w2, b2


def prepare_params(w1, b1, w2, b2):
    """One-time layout prep (run ONCE at init, not per forward call)."""
    w1p = jnp.asarray(w1, jnp.float32)              # (H, In) native layout for MXU
    b1p = jnp.asarray(b1, jnp.float32)[:, None]     # (H, 1) column bias
    w2p = jnp.asarray(w2, jnp.float32).T            # (H, C) columns for VPU fc2
    b2p = jnp.asarray(b2, jnp.float32)[:, None]     # (C, 1) column bias
    return w1p, b1p, w2p, b2p


def net_forward(x, params, *, batch_tile=None, gridless_max=2048):
    """x: (B, In) f32; params: output of prepare_params(). Returns (B, C)."""
    w1p, b1p, w2p, b2p = params
    B, In = x.shape
    H = w1p.shape[0]
    C = w2p.shape[1]

    if batch_tile is None:
        if B <= gridless_max:
            batch_tile = B
        else:
            bt = pl.cdiv(B, 4)                  # ~4 big tiles (feeds v7x's 2 TCs)
            bt = ((bt + 127) // 128) * 128      # lane-aligned tile width
            batch_tile = min(bt, 8192)          # keep 2x-buffered x tiles VMEM-safe

    if batch_tile >= B:
        # Whole problem fits comfortably in VMEM: grid-less call, full-array
        # VMEM blocks, no per-step grid bookkeeping.
        out_cb = pl.pallas_call(
            mlp_logsoftmax_kernel,
            out_shape=jax.ShapeDtypeStruct((C, B), jnp.float32),
            in_specs=[pl.BlockSpec(memory_space=pltpu.MemorySpace.VMEM)] * 5,
            out_specs=pl.BlockSpec(memory_space=pltpu.MemorySpace.VMEM),
        )(x, w1p, b1p, w2p, b2p)
        return out_cb.T

    # Batch-tiled path: tile only the batch axis with large lane-aligned tiles,
    # keep weights/biases as whole-array, VMEM-resident blocks (constant
    # index_map), and mark the batch axis parallel for megacore sharding.
    batch_tile = max(128, (batch_tile // 128) * 128)
    grid = (pl.cdiv(B, batch_tile),)
    out_cb = pl.pallas_call(
        mlp_logsoftmax_kernel,
        out_shape=jax.ShapeDtypeStruct((C, B), jnp.float32),
        grid=grid,
        in_specs=[
            pl.BlockSpec((batch_tile, In), lambda i: (i, 0)),
            pl.BlockSpec((H, In), lambda i: (0, 0)),
            pl.BlockSpec((H, 1), lambda i: (0, 0)),
            pl.BlockSpec((H, C), lambda i: (0, 0)),
            pl.BlockSpec((C, 1), lambda i: (0, 0)),
        ],
        out_specs=pl.BlockSpec((C, batch_tile), lambda i: (0, i)),
        compiler_params=pltpu.CompilerParams(
            dimension_semantics=("parallel",)),
    )(x, w1p, b1p, w2p, b2p)
    return out_cb.T


def ref_forward(xv, w1, b1, w2, b2):
    h = jnp.maximum(xv @ w1.T + b1, 0.0)
    return jax.nn.log_softmax(h @ w2.T + b2, axis=-1)


if __name__ == "__main__":
    # Module math: num_classes = 2, hidden_size = (input_size + num_classes) / 2.
    input_size = 30
    num_classes = 2
    hidden_size = (input_size + num_classes) // 2  # 16

    key = jax.random.PRNGKey(0)
    kx1, kx2, kp = jax.random.split(key, 3)
    w1, b1, w2, b2 = init_params(kp, input_size, hidden_size, num_classes)
    params = prepare_params(w1, b1, w2, b2)   # one-time layout prep

    # Small batch -> grid-less whole-problem-in-VMEM path.
    x_small = jax.random.normal(kx1, (8, input_size), jnp.float32)
    out_small = jax.block_until_ready(net_forward(x_small, params))
    assert out_small.shape == (8, num_classes)
    assert jnp.allclose(out_small, ref_forward(x_small, w1, b1, w2, b2),
                        atol=5e-5, rtol=5e-5)

    # Larger batch -> batch-tiled grid path (parallel batch axis; small tile
    # forced here only to exercise the grid machinery at test size).
    x_big = jax.random.normal(kx2, (512, input_size), jnp.float32)
    out_big = jax.block_until_ready(net_forward(x_big, params, batch_tile=128))
    assert out_big.shape == (512, num_classes)
    assert jnp.allclose(out_big, ref_forward(x_big, w1, b1, w2, b2),
                        atol=5e-5, rtol=5e-5)

    print("KERNEL_OK")
</pallas_src>

<mosaic_0001>
module attributes {stable_mosaic.version = 11 : i64} {
  func.func @mlp_logsoftmax_kernel(%arg0: memref<8x30xf32, #tpu.memory_space<vmem>>, %arg1: memref<16x30xf32, #tpu.memory_space<vmem>>, %arg2: memref<16x1xf32, #tpu.memory_space<vmem>>, %arg3: memref<16x2xf32, #tpu.memory_space<vmem>>, %arg4: memref<2x1xf32, #tpu.memory_space<vmem>>, %arg5: memref<2x8xf32, #tpu.memory_space<vmem>>) attributes {dimension_semantics = [], scalar_prefetch = 0 : i64, scratch_operands = 0 : i64, tpu.core_type = #tpu.core_type<tc>} {
    %c0 = arith.constant 0 : index
    %c0_0 = arith.constant 0 : index
    %0 = vector.load %arg1[%c0, %c0_0] : memref<16x30xf32, #tpu.memory_space<vmem>>, vector<16x30xf32>
    %c0_1 = arith.constant 0 : index
    %c0_2 = arith.constant 0 : index
    %1 = vector.load %arg0[%c0_1, %c0_2] : memref<8x30xf32, #tpu.memory_space<vmem>>, vector<8x30xf32>
    %cst = arith.constant dense<0.000000e+00> : vector<16x8xf32>
    %2 = tpu.matmul %0, %1, %cst {dimension_numbers = #tpu.dot_dimension_numbers<[1], [1], [0], [0], [0, 0, 1, 0], [], []>} : vector<16x30xf32>, vector<8x30xf32>, vector<16x8xf32> -> vector<16x8xf32>
    %c0_3 = arith.constant 0 : index
    %c0_4 = arith.constant 0 : index
    %3 = vector.load %arg2[%c0_3, %c0_4] : memref<16x1xf32, #tpu.memory_space<vmem>>, vector<16x1xf32>
    %4 = vector.broadcast %3 : vector<16x1xf32> to vector<16x8xf32>
    %5 = arith.addf %2, %4 : vector<16x8xf32>
    %cst_5 = arith.constant 0.000000e+00 : f32
    %6 = vector.broadcast %cst_5 : f32 to vector<16x8xf32>
    %7 = arith.maximumf %5, %6 : vector<16x8xf32>
    %c0_6 = arith.constant 0 : index
    %c0_7 = arith.constant 0 : index
    %8 = vector.load %arg3[%c0_6, %c0_7] : memref<16x2xf32, #tpu.memory_space<vmem>>, vector<16x2xf32>
    %9 = vector.extract_strided_slice %8 {offsets = [0, 0], sizes = [16, 1], strides = [1, 1]} : vector<16x2xf32> to vector<16x1xf32>
    %10 = vector.broadcast %9 : vector<16x1xf32> to vector<16x8xf32>
    %11 = arith.mulf %10, %7 : vector<16x8xf32>
    %cst_8 = arith.constant dense<0.000000e+00> : vector<8xf32>
    %12 = vector.multi_reduction <add>, %11, %cst_8 [0] : vector<16x8xf32> to vector<8xf32>
    %13 = vector.shape_cast %12 : vector<8xf32> to vector<1x8xf32>
    %c0_9 = arith.constant 0 : index
    %c0_10 = arith.constant 0 : index
    %14 = vector.load %arg4[%c0_9, %c0_10] : memref<2x1xf32, #tpu.memory_space<vmem>>, vector<1x1xf32>
    %15 = vector.broadcast %14 : vector<1x1xf32> to vector<1x8xf32>
    %16 = arith.addf %13, %15 : vector<1x8xf32>
    %17 = vector.extract_strided_slice %8 {offsets = [0, 1], sizes = [16, 1], strides = [1, 1]} : vector<16x2xf32> to vector<16x1xf32>
    %18 = vector.broadcast %17 : vector<16x1xf32> to vector<16x8xf32>
    %19 = arith.mulf %18, %7 : vector<16x8xf32>
    %cst_11 = arith.constant dense<0.000000e+00> : vector<8xf32>
    %20 = vector.multi_reduction <add>, %19, %cst_11 [0] : vector<16x8xf32> to vector<8xf32>
    %21 = vector.shape_cast %20 : vector<8xf32> to vector<1x8xf32>
    %c1 = arith.constant 1 : index
    %c0_12 = arith.constant 0 : index
    %22 = vector.load %arg4[%c1, %c0_12] : memref<2x1xf32, #tpu.memory_space<vmem>>, vector<1x1xf32>
    %23 = vector.broadcast %22 : vector<1x1xf32> to vector<1x8xf32>
    %24 = arith.addf %21, %23 : vector<1x8xf32>
    %25 = arith.subf %16, %24 : vector<1x8xf32>
    %26 = math.absf %25 : vector<1x8xf32>
    %27 = arith.maximumf %16, %24 : vector<1x8xf32>
    %cst_13 = arith.constant 0.000000e+00 : f32
    %28 = vector.broadcast %cst_13 : f32 to vector<1x8xf32>
    %29 = arith.subf %28, %26 : vector<1x8xf32>
    %30 = math.exp %29 : vector<1x8xf32>
    %cst_14 = arith.constant 1.000000e+00 : f32
    %31 = vector.broadcast %cst_14 : f32 to vector<1x8xf32>
    %32 = arith.addf %31, %30 : vector<1x8xf32>
    %33 = math.log %32 : vector<1x8xf32>
    %34 = arith.addf %27, %33 : vector<1x8xf32>
    %35 = arith.subf %16, %34 : vector<1x8xf32>
    %36 = arith.subf %24, %34 : vector<1x8xf32>
    %37 = tpu.concatenate %35, %36 in 0 : vector<1x8xf32>, vector<1x8xf32> -> vector<2x8xf32>
    %c0_15 = arith.constant 0 : index
    %c0_16 = arith.constant 0 : index
    %38 = vector.load %arg5[%c0_15, %c0_16] : memref<2x8xf32, #tpu.memory_space<vmem>>, vector<2x8xf32>
    tpu.vector_store %arg5[%c0_15, %c0_16], %37 {strides = array<i32>} : memref<2x8xf32, #tpu.memory_space<vmem>>, vector<2x8xf32>,
    return
  }
}

</mosaic_0001>

<llo_original>
// kernel: tpu_custom_call.1
$region0: #{tpu_custom_call.1}
  #allocation0 [shape = 'u32[]', space=smem, size = 0x4, offset = 0x4, fixed_abs, tag = 'smem constant byte address 0x4 - core index']
  #allocation1 [shape = 'u32[144,128]{1,0:T(1,128)}', space=vmem, size = 0x12000, scoped, tag = 'internal scratch']
  %s0 = inlined_call_operand.vmem [shape: f32[8,30], index: 0, kind: input, shape index: {}]
  %s1 = inlined_call_operand.vmem [shape: f32[16,30], index: 1, kind: input, shape index: {}]
  %s2 = inlined_call_operand.vmem [shape: f32[16,1], index: 2, kind: input, shape index: {}]
  %s3 = inlined_call_operand.vmem [shape: f32[16,2], index: 3, kind: input, shape index: {}]
  %s4 = inlined_call_operand.vmem [shape: f32[2,1], index: 4, kind: input, shape index: {}]
  %s5 = inlined_call_operand.hbm [shape: f32[2,8], index: 5, kind: output, shape index: {}]
  %s6 = sld [smem:[#allocation0]]
  $region30: #{tpu_custom_call.1} parent=0
    _
  %s8 = ssub.s32 1, %s6
  %s9 = scalar_select 0, %s8, %s6
  $region1: #{tpu_custom_call.1} parent=0
    #allocation2 [shape = 'u8[1024]{0}', space=vmem, size = 0x400, scoped, tag = 'output window, operand 0, single buffered']
    #allocation3 [shape = 's32[1]{0}', space=sflag, size = 0x4, scoped, tag = 'scoped memory for tpu_custom_call.1']
    %10 = vsyncpa [#allocation3], 0
    // Predicated region
    $region2: #{tpu_custom_call.1} parent=1 // pred_check
      _
    $region3: #{tpu_custom_call.1} parent=1 // pred_check_branch
      %12 = sbr.rel (0) target = $region5
    $region4: #{tpu_custom_call.1} parent=1 // pred_region
      _
    $region5: #{tpu_custom_call.1} parent=1 // pred_fallthru
      _
    // Predicated region
    $region6: #{tpu_custom_call.1} parent=1 // pred_check
      _
    $region7: #{tpu_custom_call.1} parent=1 // pred_check_branch
      %14 = sbr.rel (0) target = $region9
    $region8: #{tpu_custom_call.1} parent=1 // pred_region
      _
    $region9: #{tpu_custom_call.1} parent=1 // pred_fallthru
      _
    // Predicated region
    $region10: #{tpu_custom_call.1} parent=1 // pred_check
      _
    $region11: #{tpu_custom_call.1} parent=1 // pred_check_branch
      %16 = sbr.rel (0) target = $region13
    $region12: #{tpu_custom_call.1} parent=1 // pred_region
      _
    $region13: #{tpu_custom_call.1} parent=1 // pred_fallthru
      _
    // Predicated region
    $region14: #{tpu_custom_call.1} parent=1 // pred_check
      _
    $region15: #{tpu_custom_call.1} parent=1 // pred_check_branch
      %18 = sbr.rel (0) target = $region17
    $region16: #{tpu_custom_call.1} parent=1 // pred_region
      _
    $region17: #{tpu_custom_call.1} parent=1 // pred_fallthru
      _
    // Predicated region
    $region18: #{tpu_custom_call.1} parent=1 // pred_check
      _
    $region19: #{tpu_custom_call.1} parent=1 // pred_check_branch
      %20 = sbr.rel (0) target = $region21
    $region20: #{tpu_custom_call.1} parent=1 // pred_region
      _
    $region21: #{tpu_custom_call.1} parent=1 // pred_fallthru
      _
    %v21 = vld [vmem:[%s1] sm:$0xff]
    %v22 = vld [vmem:[%s1 + $0x8] sm:$0xff]
    %v23 = vld [vmem:[%s0] sm:$0xff]
    %v24 = vld [vmem:[%s2] sm:$0xff]
    %v25 = vld [vmem:[%s2 + $0x8] sm:$0xff]
    %27 = vset.pattern.permute.xlu0 0
    %28 = vperm.xlu0 %27, %v24
    %v29 = vpop.permute.xlu0 %28
    %32 = vset.pattern.permute.xlu0 0
    %33 = vperm.xlu0 %32, %v25
    %v34 = vpop.permute.xlu0 %33
    %vm36 = vcmask 244736
    %v38 = vsel %vm36, %v21, 0
    %v41 = vsel %vm36, %v22, 0
    %v44 = vsel %vm36, %v23, 0
    %46 = vmatprep.subr.mxu0 0.0
    %47 = vmatpush1.xpose.msra.mxu0 0.0
    %48 = vmatprep.subr.mxu0 0.0
    %49 = vmatpush1.xpose.msra.mxu0 0.0
    %50 = vmatprep.subr.mxu0 0.0
    %51 = vmatpush1.xpose.msra.mxu0 0.0
    %52 = vmatprep.subr.mxu0 0.0
    %53 = vmatpush1.xpose.msra.mxu0 0.0
    %54 = vmatprep.subr.mxu0 0.0
    %55 = vmatpush1.xpose.msra.mxu0 0.0
    %56 = vmatprep.subr.mxu0 0.0
    %57 = vmatpush1.xpose.msra.mxu0 0.0
    %58 = vmatprep.subr.mxu0 0.0
    %59 = vmatpush1.xpose.msra.mxu0 0.0
    %60 = vmatprep.subr.mxu0 0.0
    %61 = vmatpush1.xpose.msra.mxu0 0.0
    %62 = vmatprep.subr.mxu0 0.0
    %63 = vmatpush1.xpose.msra.mxu0 0.0
    %64 = vmatprep.subr.mxu0 0.0
    %65 = vmatpush1.xpose.msra.mxu0 0.0
    %66 = vmatprep.subr.mxu0 0.0
    %67 = vmatpush1.xpose.msra.mxu0 0.0
    %68 = vmatprep.subr.mxu0 0.0
    %69 = vmatpush1.xpose.msra.mxu0 0.0
    %70 = vmatprep.subr.mxu0 0.0
    %71 = vmatpush1.xpose.msra.mxu0 0.0
    %72 = vmatprep.subr.mxu0 0.0
    %73 = vmatpush1.xpose.msra.mxu0 0.0
    %74 = vmatprep.subr.mxu0 0.0
    %75 = vmatpush1.xpose.msra.mxu0 0.0
    %76 = vmatprep.subr.mxu0 0.0
    %77 = vmatpush1.xpose.msra.mxu0 %v44
    %78 = vmatprep.subr.mxu0 0.0
    %79 = vmatpush2.xpose.msra.mxu0 0.0
    %80 = vmatprep.subr.mxu0 0.0
    %81 = vmatpush2.xpose.msra.mxu0 0.0
    %82 = vmatprep.subr.mxu0 0.0
    %83 = vmatpush2.xpose.msra.mxu0 0.0
    %84 = vmatprep.subr.mxu0 0.0
    %85 = vmatpush2.xpose.msra.mxu0 0.0
    %86 = vmatprep.subr.mxu0 0.0
    %87 = vmatpush2.xpose.msra.mxu0 0.0
    %88 = vmatprep.subr.mxu0 0.0
    %89 = vmatpush2.xpose.msra.mxu0 0.0
    %90 = vmatprep.subr.mxu0 0.0
    %91 = vmatpush2.xpose.msra.mxu0 0.0
    %92 = vmatprep.subr.mxu0 0.0
    %93 = vmatpush2.xpose.msra.mxu0 0.0
    %94 = vmatprep.subr.mxu0 0.0
    %95 = vmatpush2.xpose.msra.mxu0 0.0
    %96 = vmatprep.subr.mxu0 0.0
    %97 = vmatpush2.xpose.msra.mxu0 0.0
    %98 = vmatprep.subr.mxu0 0.0
    %99 = vmatpush2.xpose.msra.mxu0 0.0
    %100 = vmatprep.subr.mxu0 0.0
    %101 = vmatpush2.xpose.msra.mxu0 0.0
    %102 = vmatprep.subr.mxu0 0.0
    %103 = vmatpush2.xpose.msra.mxu0 0.0
    %104 = vmatprep.subr.mxu0 0.0
    %105 = vmatpush2.xpose.msra.mxu0 0.0
    %106 = vmatprep.subr.mxu0 0.0
    %107 = vmatpush2.xpose.msra.mxu0 0.0
    %108 = vmatprep.subr.mxu0 0.0
    %109 = vmatpush2.xpose.msra.mxu0 0.0
    %110 = vmatprep.mubr.f32.mxu0 0.0
    %111 = vmatmul.mubr.f32.gmra.mxu0 %v38
    %v112 = vpop.f32.mrf.mxu0
    %v113 = vadd.f32 %v29, %v112
    %v114 = vpop.f32.mrf.mxu0
    %115 = vmatprep.mubr.f32.mxu0 0.0
    %116 = vmatmul.mubr.f32.gmra.mxu0 %v41
    %v117 = vpop.f32.mrf.mxu0
    %v118 = vadd.f32 %v34, %v117
    %v119 = vpop.f32.mrf.mxu0
    %120 = vdwg.mxu0
    %v121 = vmax.f32 %v113, 0.0
    %v122 = vmax.f32 %v118, 0.0
    %v123 = vld [vmem:[%s3] sm:$0xff]
    %v124 = vld [vmem:[%s3 + $0x8] sm:$0xff]
    %126 = vset.pattern.permute.xlu0 0
    %127 = vperm.xlu0 %126, %v123
    %v128 = vpop.permute.xlu0 %127
    %131 = vset.pattern.permute.xlu0 0
    %132 = vperm.xlu0 %131, %v124
    %v133 = vpop.permute.xlu0 %132
    %v135 = vmul.f32 %v128, %v121
    %v136 = vmul.f32 %v133, %v122
    %vm137 = vcmask 64512
    %v138 = vsel %vm137, %v135, 0.0
    %v139 = vsel %vm137, %v136, 0.0
    %v140 = vadd.f32 %v138, %v139
    %v141 = vrot.slane %v140, 4
    %v142 = vadd.f32 %v140, %v141
    %v143 = vrot.slane %v142, 2
    %v144 = vadd.f32 %v142, %v143
    %v145 = vrot.slane %v144, 1
    %v146 = vadd.f32 %v144, %v145
    %v147 = vld [vmem:[%s4] sm:$0x1]
    %149 = vset.pattern.permute.xlu0 0
    %150 = vperm.xlu0 %149, %v147
    %v151 = vpop.permute.xlu0 %150
    %v153 = vadd.f32 %v146, %v151
    %154 = vset.pattern.permute.xlu0 1
    %155 = vperm.xlu0 %154, %v123
    %v156 = vpop.permute.xlu0 %155
    %158 = vset.pattern.permute.xlu0 1
    %159 = vperm.xlu0 %158, %v124
    %v160 = vpop.permute.xlu0 %159
    %v162 = vmul.f32 %v156, %v121
    %v163 = vmul.f32 %v160, %v122
    %v164 = vsel %vm137, %v162, 0.0
    %v165 = vsel %vm137, %v163, 0.0
    %v166 = vadd.f32 %v164, %v165
    %v167 = vrot.slane %v166, 4
    %v168 = vadd.f32 %v166, %v167
    %v169 = vrot.slane %v168, 2
    %v170 = vadd.f32 %v168, %v169
    %v171 = vrot.slane %v170, 1
    %v172 = vadd.f32 %v170, %v171
    %v173 = vld [vmem:[%s4 + $0x1] sm:$0x1]
    %175 = vset.pattern.permute.xlu0 0
    %176 = vperm.xlu0 %175, %v173
    %v177 = vpop.permute.xlu0 %176
    %v179 = vadd.f32 %v172, %v177
    %v180 = vsub.f32 %v153, %v179
    %v181 = vand.u32 2147483647, %v180
    %v182 = vmax.f32 %v153, %v179
    %v183 = vsub.f32 0.0, %v181
    %v184 = vmul.f32 %v183, 1.442695
    %v185 = vpow.pop %v184
    %v186 = vadd.f32 %v185, 1.0
    %v187 = vlog2.pop %v186
    %v188 = vmul.f32 %v187, 0.6931472
    %v189 = vadd.f32 %v182, %v188
    %v190 = vsub.f32 %v153, %v189
    %v191 = vsub.f32 %v179, %v189
    %v193 = vrot.slane %v191, 7
    %vm195 = vcmask 1040384
    %v196 = vsel %vm195, %v190, %v193
    %vm197 = vcmask 58368
    %198 = vst.msk [vmem:[#allocation2] sm:$0x3] %vm197, %v196
    // Predicated region
    $region22: #{tpu_custom_call.1} parent=1 // pred_check
      _
    $region23: #{tpu_custom_call.1} parent=1 // pred_check_branch
      %200 = sbr.rel (0) target = $region25
    $region24: #{tpu_custom_call.1} parent=1 // pred_region
      %s202 = ssub.s32 32, 32
      %203 = vsyncadd [#allocation3], %s202
      %s205 = sshll.u32 [#allocation2], 4
      %s206 = int_to_ptr.vmem [resolvable:$true] %s205
      %208 = dma.vmem_to_hbm [thread:$0]  %s206, 32, %s5, [#allocation3]
    $region25: #{tpu_custom_call.1} parent=1 // pred_fallthru
      _
    // Predicated region
    $region26: #{tpu_custom_call.1} parent=1 // pred_check
      _
    $region27: #{tpu_custom_call.1} parent=1 // pred_check_branch
      %210 = sbr.rel (0) target = $region29
    $region28: #{tpu_custom_call.1} parent=1 // pred_region
      %211 = dma.done [#allocation3], 32
    $region29: #{tpu_custom_call.1} parent=1 // pred_fallthru
      _
    %212 = vsyncpa [#allocation3], 1

</llo_original>
